<compile_context>
chip_gen: v6e
topology: v6e:2x2x1
jax: 0.10.0
libtpu: 0.0.40
codegen_flags: <defaults>
</compile_context>

<pallas_src>
import jax
import jax.numpy as jnp
from jax.experimental import pallas as pl
from jax.experimental.pallas import tpu as pltpu

NUM_BINS = 8
NUM_CH = 10                       # 8 cosine channels + (dx, dy)
LANES = 128                       # fast (lane) axis width on the aligned path
BLOCK_BYTES_MAX = 9 * 1024 * 1024 # in+out bytes per grid step (~1024 rows @128)
VMEM_LIMIT_BYTES = 32 * 1024 * 1024


def _hist_kernel(x_ref, o_ref):
    # x_ref: (10, R_BLK, L)  -> 8 cosine channels + dx + dy
    # o_ref: (8,  R_BLK, L)  -> weighted histogram (magnitude at argmax bin)
    gx = x_ref[NUM_BINS]                     # (R_BLK, L)
    gy = x_ref[NUM_BINS + 1]                 # (R_BLK, L)
    mag = jnp.sqrt(gx * gx + gy * gy)        # == torch.norm(im_grads, dim=1)

    # Unrolled running max / argmax over the 8 leading-axis cosine channels.
    # Strict '>' keeps the *first* maximal index on ties (torch.argmax).
    # TODO(synk): NaN in cosine channels 1..7 is never selected (torch would
    # return the NaN's index); irrelevant for finite cosine inputs.
    best = x_ref[0]
    best_idx = jnp.zeros(best.shape, jnp.int32)
    for c in range(1, NUM_BINS):
        v = x_ref[c]
        gt = v > best
        best = jnp.where(gt, v, best)
        best_idx = jnp.where(gt, c, best_idx)

    # Scatter the magnitude into the winning bin (no bool->f32 cast, no mul).
    for c in range(NUM_BINS):
        o_ref[c] = jnp.where(best_idx == c, mag, 0.0)


def _round_up(v: int, m: int) -> int:
    return ((v + m - 1) // m) * m


def histogram_layer(x: jax.Array) -> jax.Array:
    """x: (1, 10, M, N) float32 -> (1, 8, M, N) float32."""
    n, c, h, w = x.shape
    assert n == 1 and c == NUM_CH, "expected input of shape (1, 10, M, N)"

    hw = h * w
    if hw % LANES == 0:
        # Fast path: free metadata reshape to a lane-dense (C, R, 128) slab.
        rows, lanes = hw // LANES, LANES
    else:
        # Ragged path: run directly on (C, H, W).  No pad / crop HBM passes;
        # only the last-lane stores are masked when W % 128 != 0.
        rows, lanes = h, w
    x3 = x.reshape(NUM_CH, rows, lanes)

    # Row-block size: cap per-step in+out bytes at BLOCK_BYTES_MAX, and split
    # into at least two ~equal blocks when possible so the parallel grid axis
    # shards across both v7x TensorCores.
    itemsize = jnp.dtype(x.dtype).itemsize
    bytes_per_row = (NUM_CH + NUM_BINS) * lanes * itemsize
    r_cap = max(8, (BLOCK_BYTES_MAX // bytes_per_row) // 8 * 8)
    if rows <= 8:
        r_blk = rows                                     # single full-extent block
    else:
        r_blk = min(r_cap, _round_up(pl.cdiv(rows, 2), 8))
    grid = pl.cdiv(rows, r_blk)                          # ragged last block masked

    out3 = pl.pallas_call(
        _hist_kernel,
        out_shape=jax.ShapeDtypeStruct((NUM_BINS, rows, lanes), x.dtype),
        grid_spec=pltpu.PrefetchScalarGridSpec(
            num_scalar_prefetch=0,
            grid=(grid,),
            in_specs=[pl.BlockSpec((NUM_CH, r_blk, lanes), lambda i: (0, i, 0))],
            out_specs=pl.BlockSpec((NUM_BINS, r_blk, lanes), lambda i: (0, i, 0)),
        ),
        compiler_params=pltpu.CompilerParams(
            dimension_semantics=("parallel",),   # shards row blocks across TCs (v7x)
            vmem_limit_bytes=VMEM_LIMIT_BYTES,   # ~20 MiB double-buffered budget
        ),
    )(x3)

    return out3.reshape(1, NUM_BINS, h, w)


def _reference(x: jax.Array) -> jax.Array:
    """Pure-JAX reference mirroring the PyTorch forward exactly."""
    cosines = x[:, :8, :, :]
    im_grads = x[:, 8:, :, :]
    bin_idxs = jnp.argmax(cosines, axis=1)                        # (1, M, N)
    magnitudes = jnp.linalg.norm(im_grads, axis=1)                # (1, M, N)
    one_hot = jax.nn.one_hot(bin_idxs, 8, axis=1, dtype=x.dtype)  # (1, 8, M, N)
    return one_hot * magnitudes[:, None, :, :]


if __name__ == "__main__":
    key = jax.random.PRNGKey(0)

    # Primary small case: H*W is a multiple of 128 (zero-copy lane-dense path).
    M, N = 16, 16
    x = jax.random.normal(key, (1, NUM_CH, M, N), dtype=jnp.float32)
    out = histogram_layer(x)
    jax.block_until_ready(out)
    ref = _reference(x)
    assert out.shape == (1, NUM_BINS, M, N)
    assert jnp.allclose(out, ref, atol=1e-5, rtol=1e-5)

    # Ragged spatial size: H*W % 128 != 0 -> direct (C, H, W) path, no pad/crop.
    x_odd = jax.random.normal(jax.random.PRNGKey(1), (1, NUM_CH, 12, 13),
                              dtype=jnp.float32)
    out_odd = histogram_layer(x_odd)
    jax.block_until_ready(out_odd)
    assert jnp.allclose(out_odd, _reference(x_odd), atol=1e-5, rtol=1e-5)

    # Multi-block grid with a masked ragged last block: r = 10 rows of 128
    # lanes, split into blocks of 8 -> grid = 2 (exercises the 2-TC split).
    x_mb = jax.random.normal(jax.random.PRNGKey(2), (1, NUM_CH, 40, 32),
                             dtype=jnp.float32)
    out_mb = histogram_layer(x_mb)
    jax.block_until_ready(out_mb)
    assert jnp.allclose(out_mb, _reference(x_mb), atol=1e-5, rtol=1e-5)

    print("KERNEL_OK")
</pallas_src>

<mosaic_0001>
module attributes {stable_mosaic.version = 11 : i64} {
  func.func @_hist_kernel(%arg0: i32, %arg1: memref<10x2x128xf32, #tpu.memory_space<vmem>>, %arg2: memref<8x2x128xf32, #tpu.memory_space<vmem>>) attributes {dimension_semantics = [#tpu.dimension_semantics<parallel>], iteration_bounds = array<i64: 1>, scalar_prefetch = 0 : i64, scratch_operands = 0 : i64, tpu.core_type = #tpu.core_type<tc>, window_params = [{transform_indices = @transform_0, window_bounds = array<i64: 10, 2, 128>}, {transform_indices = @transform_1, window_bounds = array<i64: 8, 2, 128>}]} {
    %c8 = arith.constant 8 : index
    %c0 = arith.constant 0 : index
    %c0_0 = arith.constant 0 : index
    %0 = vector.load %arg1[%c8, %c0, %c0_0] : memref<10x2x128xf32, #tpu.memory_space<vmem>>, vector<1x2x128xf32>
    %1 = vector.shape_cast %0 : vector<1x2x128xf32> to vector<2x128xf32>
    %c9 = arith.constant 9 : index
    %c0_1 = arith.constant 0 : index
    %c0_2 = arith.constant 0 : index
    %2 = vector.load %arg1[%c9, %c0_1, %c0_2] : memref<10x2x128xf32, #tpu.memory_space<vmem>>, vector<1x2x128xf32>
    %3 = vector.shape_cast %2 : vector<1x2x128xf32> to vector<2x128xf32>
    %4 = arith.mulf %1, %1 : vector<2x128xf32>
    %5 = arith.mulf %3, %3 : vector<2x128xf32>
    %6 = arith.addf %4, %5 : vector<2x128xf32>
    %7 = math.sqrt %6 : vector<2x128xf32>
    %c0_3 = arith.constant 0 : index
    %c0_4 = arith.constant 0 : index
    %c0_5 = arith.constant 0 : index
    %8 = vector.load %arg1[%c0_3, %c0_4, %c0_5] : memref<10x2x128xf32, #tpu.memory_space<vmem>>, vector<1x2x128xf32>
    %9 = vector.shape_cast %8 : vector<1x2x128xf32> to vector<2x128xf32>
    %c0_i32 = arith.constant 0 : i32
    %10 = vector.broadcast %c0_i32 : i32 to vector<2x128xi32>
    %c1 = arith.constant 1 : index
    %c0_6 = arith.constant 0 : index
    %c0_7 = arith.constant 0 : index
    %11 = vector.load %arg1[%c1, %c0_6, %c0_7] : memref<10x2x128xf32, #tpu.memory_space<vmem>>, vector<1x2x128xf32>
    %12 = vector.shape_cast %11 : vector<1x2x128xf32> to vector<2x128xf32>
    %13 = arith.cmpf ogt, %12, %9 : vector<2x128xf32>
    %14 = arith.select %13, %12, %9 : vector<2x128xi1>, vector<2x128xf32>
    %c1_i32 = arith.constant 1 : i32
    %15 = vector.broadcast %c1_i32 : i32 to vector<2x128xi32>
    %16 = arith.select %13, %15, %10 : vector<2x128xi1>, vector<2x128xi32>
    %c2 = arith.constant 2 : index
    %c0_8 = arith.constant 0 : index
    %c0_9 = arith.constant 0 : index
    %17 = vector.load %arg1[%c2, %c0_8, %c0_9] : memref<10x2x128xf32, #tpu.memory_space<vmem>>, vector<1x2x128xf32>
    %18 = vector.shape_cast %17 : vector<1x2x128xf32> to vector<2x128xf32>
    %19 = arith.cmpf ogt, %18, %14 : vector<2x128xf32>
    %20 = arith.select %19, %18, %14 : vector<2x128xi1>, vector<2x128xf32>
    %c2_i32 = arith.constant 2 : i32
    %21 = vector.broadcast %c2_i32 : i32 to vector<2x128xi32>
    %22 = arith.select %19, %21, %16 : vector<2x128xi1>, vector<2x128xi32>
    %c3 = arith.constant 3 : index
    %c0_10 = arith.constant 0 : index
    %c0_11 = arith.constant 0 : index
    %23 = vector.load %arg1[%c3, %c0_10, %c0_11] : memref<10x2x128xf32, #tpu.memory_space<vmem>>, vector<1x2x128xf32>
    %24 = vector.shape_cast %23 : vector<1x2x128xf32> to vector<2x128xf32>
    %25 = arith.cmpf ogt, %24, %20 : vector<2x128xf32>
    %26 = arith.select %25, %24, %20 : vector<2x128xi1>, vector<2x128xf32>
    %c3_i32 = arith.constant 3 : i32
    %27 = vector.broadcast %c3_i32 : i32 to vector<2x128xi32>
    %28 = arith.select %25, %27, %22 : vector<2x128xi1>, vector<2x128xi32>
    %c4 = arith.constant 4 : index
    %c0_12 = arith.constant 0 : index
    %c0_13 = arith.constant 0 : index
    %29 = vector.load %arg1[%c4, %c0_12, %c0_13] : memref<10x2x128xf32, #tpu.memory_space<vmem>>, vector<1x2x128xf32>
    %30 = vector.shape_cast %29 : vector<1x2x128xf32> to vector<2x128xf32>
    %31 = arith.cmpf ogt, %30, %26 : vector<2x128xf32>
    %32 = arith.select %31, %30, %26 : vector<2x128xi1>, vector<2x128xf32>
    %c4_i32 = arith.constant 4 : i32
    %33 = vector.broadcast %c4_i32 : i32 to vector<2x128xi32>
    %34 = arith.select %31, %33, %28 : vector<2x128xi1>, vector<2x128xi32>
    %c5 = arith.constant 5 : index
    %c0_14 = arith.constant 0 : index
    %c0_15 = arith.constant 0 : index
    %35 = vector.load %arg1[%c5, %c0_14, %c0_15] : memref<10x2x128xf32, #tpu.memory_space<vmem>>, vector<1x2x128xf32>
    %36 = vector.shape_cast %35 : vector<1x2x128xf32> to vector<2x128xf32>
    %37 = arith.cmpf ogt, %36, %32 : vector<2x128xf32>
    %38 = arith.select %37, %36, %32 : vector<2x128xi1>, vector<2x128xf32>
    %c5_i32 = arith.constant 5 : i32
    %39 = vector.broadcast %c5_i32 : i32 to vector<2x128xi32>
    %40 = arith.select %37, %39, %34 : vector<2x128xi1>, vector<2x128xi32>
    %c6 = arith.constant 6 : index
    %c0_16 = arith.constant 0 : index
    %c0_17 = arith.constant 0 : index
    %41 = vector.load %arg1[%c6, %c0_16, %c0_17] : memref<10x2x128xf32, #tpu.memory_space<vmem>>, vector<1x2x128xf32>
    %42 = vector.shape_cast %41 : vector<1x2x128xf32> to vector<2x128xf32>
    %43 = arith.cmpf ogt, %42, %38 : vector<2x128xf32>
    %44 = arith.select %43, %42, %38 : vector<2x128xi1>, vector<2x128xf32>
    %c6_i32 = arith.constant 6 : i32
    %45 = vector.broadcast %c6_i32 : i32 to vector<2x128xi32>
    %46 = arith.select %43, %45, %40 : vector<2x128xi1>, vector<2x128xi32>
    %c7 = arith.constant 7 : index
    %c0_18 = arith.constant 0 : index
    %c0_19 = arith.constant 0 : index
    %47 = vector.load %arg1[%c7, %c0_18, %c0_19] : memref<10x2x128xf32, #tpu.memory_space<vmem>>, vector<1x2x128xf32>
    %48 = vector.shape_cast %47 : vector<1x2x128xf32> to vector<2x128xf32>
    %49 = arith.cmpf ogt, %48, %44 : vector<2x128xf32>
    %c7_i32 = arith.constant 7 : i32
    %50 = vector.broadcast %c7_i32 : i32 to vector<2x128xi32>
    %51 = arith.select %49, %50, %46 : vector<2x128xi1>, vector<2x128xi32>
    %c0_i32_20 = arith.constant 0 : i32
    %52 = vector.broadcast %c0_i32_20 : i32 to vector<2x128xi32>
    %53 = arith.cmpi eq, %51, %52 : vector<2x128xi32>
    %cst = arith.constant 0.000000e+00 : f32
    %54 = vector.broadcast %cst : f32 to vector<2x128xf32>
    %55 = arith.select %53, %7, %54 : vector<2x128xi1>, vector<2x128xf32>
    %c0_21 = arith.constant 0 : index
    %c0_22 = arith.constant 0 : index
    %c0_23 = arith.constant 0 : index
    %56 = vector.load %arg2[%c0_21, %c0_22, %c0_23] : memref<8x2x128xf32, #tpu.memory_space<vmem>>, vector<1x2x128xf32>
    %57 = vector.shape_cast %56 : vector<1x2x128xf32> to vector<2x128xf32>
    %58 = vector.shape_cast %55 : vector<2x128xf32> to vector<1x2x128xf32>
    tpu.vector_store %arg2[%c0_21, %c0_22, %c0_23], %58 {strides = array<i32>} : memref<8x2x128xf32, #tpu.memory_space<vmem>>, vector<1x2x128xf32>,
    %c1_i32_24 = arith.constant 1 : i32
    %59 = vector.broadcast %c1_i32_24 : i32 to vector<2x128xi32>
    %60 = arith.cmpi eq, %51, %59 : vector<2x128xi32>
    %cst_25 = arith.constant 0.000000e+00 : f32
    %61 = vector.broadcast %cst_25 : f32 to vector<2x128xf32>
    %62 = arith.select %60, %7, %61 : vector<2x128xi1>, vector<2x128xf32>
    %c1_26 = arith.constant 1 : index
    %c0_27 = arith.constant 0 : index
    %c0_28 = arith.constant 0 : index
    %63 = vector.load %arg2[%c1_26, %c0_27, %c0_28] : memref<8x2x128xf32, #tpu.memory_space<vmem>>, vector<1x2x128xf32>
    %64 = vector.shape_cast %63 : vector<1x2x128xf32> to vector<2x128xf32>
    %65 = vector.shape_cast %62 : vector<2x128xf32> to vector<1x2x128xf32>
    tpu.vector_store %arg2[%c1_26, %c0_27, %c0_28], %65 {strides = array<i32>} : memref<8x2x128xf32, #tpu.memory_space<vmem>>, vector<1x2x128xf32>,
    %c2_i32_29 = arith.constant 2 : i32
    %66 = vector.broadcast %c2_i32_29 : i32 to vector<2x128xi32>
    %67 = arith.cmpi eq, %51, %66 : vector<2x128xi32>
    %cst_30 = arith.constant 0.000000e+00 : f32
    %68 = vector.broadcast %cst_30 : f32 to vector<2x128xf32>
    %69 = arith.select %67, %7, %68 : vector<2x128xi1>, vector<2x128xf32>
    %c2_31 = arith.constant 2 : index
    %c0_32 = arith.constant 0 : index
    %c0_33 = arith.constant 0 : index
    %70 = vector.load %arg2[%c2_31, %c0_32, %c0_33] : memref<8x2x128xf32, #tpu.memory_space<vmem>>, vector<1x2x128xf32>
    %71 = vector.shape_cast %70 : vector<1x2x128xf32> to vector<2x128xf32>
    %72 = vector.shape_cast %69 : vector<2x128xf32> to vector<1x2x128xf32>
    tpu.vector_store %arg2[%c2_31, %c0_32, %c0_33], %72 {strides = array<i32>} : memref<8x2x128xf32, #tpu.memory_space<vmem>>, vector<1x2x128xf32>,
    %c3_i32_34 = arith.constant 3 : i32
    %73 = vector.broadcast %c3_i32_34 : i32 to vector<2x128xi32>
    %74 = arith.cmpi eq, %51, %73 : vector<2x128xi32>
    %cst_35 = arith.constant 0.000000e+00 : f32
    %75 = vector.broadcast %cst_35 : f32 to vector<2x128xf32>
    %76 = arith.select %74, %7, %75 : vector<2x128xi1>, vector<2x128xf32>
    %c3_36 = arith.constant 3 : index
    %c0_37 = arith.constant 0 : index
    %c0_38 = arith.constant 0 : index
    %77 = vector.load %arg2[%c3_36, %c0_37, %c0_38] : memref<8x2x128xf32, #tpu.memory_space<vmem>>, vector<1x2x128xf32>
    %78 = vector.shape_cast %77 : vector<1x2x128xf32> to vector<2x128xf32>
    %79 = vector.shape_cast %76 : vector<2x128xf32> to vector<1x2x128xf32>
    tpu.vector_store %arg2[%c3_36, %c0_37, %c0_38], %79 {strides = array<i32>} : memref<8x2x128xf32, #tpu.memory_space<vmem>>, vector<1x2x128xf32>,
    %c4_i32_39 = arith.constant 4 : i32
    %80 = vector.broadcast %c4_i32_39 : i32 to vector<2x128xi32>
    %81 = arith.cmpi eq, %51, %80 : vector<2x128xi32>
    %cst_40 = arith.constant 0.000000e+00 : f32
    %82 = vector.broadcast %cst_40 : f32 to vector<2x128xf32>
    %83 = arith.select %81, %7, %82 : vector<2x128xi1>, vector<2x128xf32>
    %c4_41 = arith.constant 4 : index
    %c0_42 = arith.constant 0 : index
    %c0_43 = arith.constant 0 : index
    %84 = vector.load %arg2[%c4_41, %c0_42, %c0_43] : memref<8x2x128xf32, #tpu.memory_space<vmem>>, vector<1x2x128xf32>
    %85 = vector.shape_cast %84 : vector<1x2x128xf32> to vector<2x128xf32>
    %86 = vector.shape_cast %83 : vector<2x128xf32> to vector<1x2x128xf32>
    tpu.vector_store %arg2[%c4_41, %c0_42, %c0_43], %86 {strides = array<i32>} : memref<8x2x128xf32, #tpu.memory_space<vmem>>, vector<1x2x128xf32>,
    %c5_i32_44 = arith.constant 5 : i32
    %87 = vector.broadcast %c5_i32_44 : i32 to vector<2x128xi32>
    %88 = arith.cmpi eq, %51, %87 : vector<2x128xi32>
    %cst_45 = arith.constant 0.000000e+00 : f32
    %89 = vector.broadcast %cst_45 : f32 to vector<2x128xf32>
    %90 = arith.select %88, %7, %89 : vector<2x128xi1>, vector<2x128xf32>
    %c5_46 = arith.constant 5 : index
    %c0_47 = arith.constant 0 : index
    %c0_48 = arith.constant 0 : index
    %91 = vector.load %arg2[%c5_46, %c0_47, %c0_48] : memref<8x2x128xf32, #tpu.memory_space<vmem>>, vector<1x2x128xf32>
    %92 = vector.shape_cast %91 : vector<1x2x128xf32> to vector<2x128xf32>
    %93 = vector.shape_cast %90 : vector<2x128xf32> to vector<1x2x128xf32>
    tpu.vector_store %arg2[%c5_46, %c0_47, %c0_48], %93 {strides = array<i32>} : memref<8x2x128xf32, #tpu.memory_space<vmem>>, vector<1x2x128xf32>,
    %c6_i32_49 = arith.constant 6 : i32
    %94 = vector.broadcast %c6_i32_49 : i32 to vector<2x128xi32>
    %95 = arith.cmpi eq, %51, %94 : vector<2x128xi32>
    %cst_50 = arith.constant 0.000000e+00 : f32
    %96 = vector.broadcast %cst_50 : f32 to vector<2x128xf32>
    %97 = arith.select %95, %7, %96 : vector<2x128xi1>, vector<2x128xf32>
    %c6_51 = arith.constant 6 : index
    %c0_52 = arith.constant 0 : index
    %c0_53 = arith.constant 0 : index
    %98 = vector.load %arg2[%c6_51, %c0_52, %c0_53] : memref<8x2x128xf32, #tpu.memory_space<vmem>>, vector<1x2x128xf32>
    %99 = vector.shape_cast %98 : vector<1x2x128xf32> to vector<2x128xf32>
    %100 = vector.shape_cast %97 : vector<2x128xf32> to vector<1x2x128xf32>
    tpu.vector_store %arg2[%c6_51, %c0_52, %c0_53], %100 {strides = array<i32>} : memref<8x2x128xf32, #tpu.memory_space<vmem>>, vector<1x2x128xf32>,
    %c7_i32_54 = arith.constant 7 : i32
    %101 = vector.broadcast %c7_i32_54 : i32 to vector<2x128xi32>
    %102 = arith.cmpi eq, %51, %101 : vector<2x128xi32>
    %cst_55 = arith.constant 0.000000e+00 : f32
    %103 = vector.broadcast %cst_55 : f32 to vector<2x128xf32>
    %104 = arith.select %102, %7, %103 : vector<2x128xi1>, vector<2x128xf32>
    %c7_56 = arith.constant 7 : index
    %c0_57 = arith.constant 0 : index
    %c0_58 = arith.constant 0 : index
    %105 = vector.load %arg2[%c7_56, %c0_57, %c0_58] : memref<8x2x128xf32, #tpu.memory_space<vmem>>, vector<1x2x128xf32>
    %106 = vector.shape_cast %105 : vector<1x2x128xf32> to vector<2x128xf32>
    %107 = vector.shape_cast %104 : vector<2x128xf32> to vector<1x2x128xf32>
    tpu.vector_store %arg2[%c7_56, %c0_57, %c0_58], %107 {strides = array<i32>} : memref<8x2x128xf32, #tpu.memory_space<vmem>>, vector<1x2x128xf32>,
    return
  }
  func.func @transform_0(%arg0: i32) -> (i32, i32, i32) {
    %c0_i32 = arith.constant 0 : i32
    %c0_i32_0 = arith.constant 0 : i32
    %c0_i32_1 = arith.constant 0 : i32
    return %c0_i32, %arg0, %c0_i32_0 : i32, i32, i32
  }
  func.func @transform_1(%arg0: i32) -> (i32, i32, i32) {
    %c0_i32 = arith.constant 0 : i32
    %c0_i32_0 = arith.constant 0 : i32
    %c0_i32_1 = arith.constant 0 : i32
    return %c0_i32, %arg0, %c0_i32_0 : i32, i32, i32
  }
}

</mosaic_0001>

<llo_original>
// kernel: tpu_custom_call.1
$region0: #{tpu_custom_call.1}
  #allocation0 [shape = 'u32[]', space=smem, size = 0x4, offset = 0x4, fixed_abs, tag = 'smem constant byte address 0x4 - core index']
  #allocation1 [shape = 'u32[144,128]{1,0:T(1,128)}', space=vmem, size = 0x12000, scoped, tag = 'internal scratch']
  %s0 = inlined_call_operand.hbm [shape: f32[10,2,128], index: 0, kind: input, shape index: {}]
  %s1 = inlined_call_operand.hbm [shape: f32[8,2,128], index: 1, kind: output, shape index: {}]
  %s2 = sld [smem:[#allocation0]]
  $region18: #{tpu_custom_call.1} parent=0
    _
  %s4 = ssub.s32 1, %s2
  %s5 = scalar_select 0, %s4, %s2
  $region1: #{tpu_custom_call.1} parent=0
    #allocation2 [shape = 'u8[10240]{0}', space=vmem, size = 0x2800, scoped, tag = 'input window, operand 0, single buffered']
    #allocation3 [shape = 's32[1]{0}', space=sflag, size = 0x4, scoped, tag = 'scoped memory for tpu_custom_call.1']
    #allocation4 [shape = 's32[1]{0}', space=sflag, size = 0x4, scoped, tag = 'scoped memory for tpu_custom_call.1']
    #allocation5 [shape = 'u8[8192]{0}', space=vmem, size = 0x2000, scoped, tag = 'output window, operand 0, single buffered']
    %6 = vsyncpa [#allocation3], 0
    %7 = vsyncpa [#allocation4], 0
    // Predicated region
    $region2: #{tpu_custom_call.1} parent=1 // pred_check
      _
    $region3: #{tpu_custom_call.1} parent=1 // pred_check_branch
      %9 = sbr.rel (0) target = $region5
    $region4: #{tpu_custom_call.1} parent=1 // pred_region
      %s11 = ssub.s32 320, 320
      %12 = vsyncadd [#allocation3], %s11
      %s13 = sshll.u32 [#allocation2], 4
      %s14 = int_to_ptr.vmem [resolvable:$true] %s13
      %19 = dma.hbm_to_vmem [thread:$0]  %s0, 320, %s14, [#allocation3], 32, 32, 2
    $region5: #{tpu_custom_call.1} parent=1 // pred_fallthru
      _
    // Predicated region
    $region6: #{tpu_custom_call.1} parent=1 // pred_check
      _
    $region7: #{tpu_custom_call.1} parent=1 // pred_check_branch
      %21 = sbr.rel (0) target = $region9
    $region8: #{tpu_custom_call.1} parent=1 // pred_region
      %22 = dma.done [#allocation3], 320
    $region9: #{tpu_custom_call.1} parent=1 // pred_fallthru
      _
    %s23 = scalar_lea.vmem [#allocation2], 16
    %v24 = vld [vmem:[%s23] sm:$0x3]
    %s25 = scalar_lea.vmem [#allocation2], 18
    %v26 = vld [vmem:[%s25] sm:$0x3]
    %v27 = vmul.f32 %v24, %v24
    %v28 = vmul.f32 %v26, %v26
    %v29 = vadd.f32 %v27, %v28
    %v30 = vrsqrt.pop %v29
    %v31 = vmul.f32 %v29, %v30
    %vm32 = vcmp.eq.f32.partialorder %v29, inf
    %v33 = vsel %vm32, %v29, %v31
    %vm34 = vcmp.eq.f32.partialorder %v29, 0.0
    %v35 = vand.u32 %v29, 2147483648
    %v36 = vsel %vm34, %v35, %v33
    %v37 = vld [vmem:[#allocation2] sm:$0x3]
    %s38 = scalar_lea.vmem [#allocation2], 2
    %v39 = vld [vmem:[%s38] sm:$0x3]
    %vm40 = vcmp.gt.f32.partialorder %v39, %v37
    %v41 = vsel %vm40, %v39, %v37
    %v42 = vsel %vm40, 1, 0
    %s43 = scalar_lea.vmem [#allocation2], 4
    %v44 = vld [vmem:[%s43] sm:$0x3]
    %vm45 = vcmp.gt.f32.partialorder %v44, %v41
    %v46 = vsel %vm45, %v44, %v41
    %v47 = vsel %vm45, 2, %v42
    %s48 = scalar_lea.vmem [#allocation2], 6
    %v49 = vld [vmem:[%s48] sm:$0x3]
    %vm50 = vcmp.gt.f32.partialorder %v49, %v46
    %v51 = vsel %vm50, %v49, %v46
    %v52 = vsel %vm50, 3, %v47
    %s53 = scalar_lea.vmem [#allocation2], 8
    %v54 = vld [vmem:[%s53] sm:$0x3]
    %vm55 = vcmp.gt.f32.partialorder %v54, %v51
    %v56 = vsel %vm55, %v54, %v51
    %v57 = vsel %vm55, 4, %v52
    %s58 = scalar_lea.vmem [#allocation2], 10
    %v59 = vld [vmem:[%s58] sm:$0x3]
    %vm60 = vcmp.gt.f32.partialorder %v59, %v56
    %v61 = vsel %vm60, %v59, %v56
    %v62 = vsel %vm60, 5, %v57
    %s63 = scalar_lea.vmem [#allocation2], 12
    %v64 = vld [vmem:[%s63] sm:$0x3]
    %vm65 = vcmp.gt.f32.partialorder %v64, %v61
    %v66 = vsel %vm65, %v64, %v61
    %v67 = vsel %vm65, 6, %v62
    %s68 = scalar_lea.vmem [#allocation2], 14
    %v69 = vld [vmem:[%s68] sm:$0x3]
    %vm70 = vcmp.gt.f32.partialorder %v69, %v66
    %v71 = vsel %vm70, 7, %v67
    %vm72 = vcmp.eq.s32.totalorder %v71, 0
    %v73 = vsel %vm72, %v36, 0.0
    %74 = vst [vmem:[#allocation5] sm:$0x3] %v73
    %vm75 = vcmp.eq.s32.totalorder %v71, 1
    %v76 = vsel %vm75, %v36, 0.0
    %s77 = scalar_lea.vmem [#allocation5], 2
    %78 = vst [vmem:[%s77] sm:$0x3] %v76
    %vm79 = vcmp.eq.s32.totalorder %v71, 2
    %v80 = vsel %vm79, %v36, 0.0
    %s81 = scalar_lea.vmem [#allocation5], 4
    %82 = vst [vmem:[%s81] sm:$0x3] %v80
    %vm83 = vcmp.eq.s32.totalorder %v71, 3
    %v84 = vsel %vm83, %v36, 0.0
    %s85 = scalar_lea.vmem [#allocation5], 6
    %86 = vst [vmem:[%s85] sm:$0x3] %v84
    %vm87 = vcmp.eq.s32.totalorder %v71, 4
    %v88 = vsel %vm87, %v36, 0.0
    %s89 = scalar_lea.vmem [#allocation5], 8
    %90 = vst [vmem:[%s89] sm:$0x3] %v88
    %vm91 = vcmp.eq.s32.totalorder %v71, 5
    %v92 = vsel %vm91, %v36, 0.0
    %s93 = scalar_lea.vmem [#allocation5], 10
    %94 = vst [vmem:[%s93] sm:$0x3] %v92
    %vm95 = vcmp.eq.s32.totalorder %v71, 6
    %v96 = vsel %vm95, %v36, 0.0
    %s97 = scalar_lea.vmem [#allocation5], 12
    %98 = vst [vmem:[%s97] sm:$0x3] %v96
    %vm99 = vcmp.eq.s32.totalorder %v71, 7
    %v100 = vsel %vm99, %v36, 0.0
    %s101 = scalar_lea.vmem [#allocation5], 14
    %102 = vst [vmem:[%s101] sm:$0x3] %v100
    // Predicated region
    $region10: #{tpu_custom_call.1} parent=1 // pred_check
      _
    $region11: #{tpu_custom_call.1} parent=1 // pred_check_branch
      %104 = sbr.rel (0) target = $region13
    $region12: #{tpu_custom_call.1} parent=1 // pred_region
      %s106 = ssub.s32 256, 256
      %107 = vsyncadd [#allocation4], %s106
      %s108 = sshll.u32 [#allocation5], 4
      %s109 = int_to_ptr.vmem [resolvable:$true] %s108
      %114 = dma.vmem_to_hbm [thread:$0]  %s109, 256, %s1, [#allocation4], 32, 32, 2
    $region13: #{tpu_custom_call.1} parent=1 // pred_fallthru
      _
    // Predicated region
    $region14: #{tpu_custom_call.1} parent=1 // pred_check
      _
    $region15: #{tpu_custom_call.1} parent=1 // pred_check_branch
      %116 = sbr.rel (0) target = $region17
    $region16: #{tpu_custom_call.1} parent=1 // pred_region
      %117 = dma.done [#allocation4], 256
    $region17: #{tpu_custom_call.1} parent=1 // pred_fallthru
      _
    %118 = vsyncpa [#allocation3], 1
    %119 = vsyncpa [#allocation4], 1

</llo_original>
